<compile_context>
chip_gen: v7x
topology: tpu7x:2x2x1
jax: 0.10.0
libtpu: 0.0.40
codegen_flags: <defaults>
</compile_context>

<pallas_src>
import functools

import jax
import jax.numpy as jnp
from jax.experimental import pallas as pl
from jax.experimental.pallas import tpu as pltpu


_SUBLANE = 8


def _device_profile():
    """Return (bytes_per_input_tile, num_tensorcores) tuned per TPU generation."""
    try:
        kind = jax.devices()[0].device_kind.lower()
    except Exception:  # pragma: no cover - defensive
        kind = ""
    if "v7" in kind or "7x" in kind:
        # v7x: 2 TensorCores, ~3.2 TB/s HBM -> bigger tiles to amortize the
        # ~0.35us/step overhead.  16 MiB double-buffer footprint < 32 MiB
        # scoped default (64 MiB physical).
        return 4 << 20, 2
    if "v6" in kind:
        # v6e: single TC; 16 MiB footprint fits the 32 MiB scoped default.
        return 4 << 20, 1
    # v5e / older / unknown: stay safely under the 16 MiB scoped-VMEM default.
    return 2 << 20, 1


def _choose_tiling(total, itemsize, tile_bytes, ncores_hw):
    """Pick (lane, rows, tm, nb, ncores, n_steps); None if 128 does not divide total."""
    lane = None
    for cand in (1024, 512, 256, 128):
        if total % cand == 0:
            lane = cand
            break
    if lane is None:
        return None
    rows = total // lane
    tm_target = max(_SUBLANE,
                    (tile_bytes // (lane * itemsize)) // _SUBLANE * _SUBLANE)
    if rows <= tm_target:
        tm = rows  # full first dim: always a legal block shape
    else:
        tm = tm_target
        # Prefer an exact divisor of rows (avoids the masked partial block)
        # as long as it keeps tiles within 2x of the target size.
        lower = max(tm_target // 2, _SUBLANE)
        for cand in range(tm_target, lower - 1, -_SUBLANE):
            if rows % cand == 0:
                tm = cand
                break
    nb = -(-rows // tm)                       # ceil: number of row-blocks
    ncores = max(1, min(ncores_hw, nb))
    n_steps = -(-nb // ncores)
    return lane, rows, tm, nb, ncores, n_steps


def _lambda_loss_kernel(enc_ref, lam_ref, out_ref, *,
                        tm, lane, sub, rows, n_steps, mask_needed):
    c = pl.program_id(0)
    s = pl.program_id(1)

    # Output block (1, 3, sub, lane) stays resident across the step axis
    # (same block index for every s) -> it is the accumulator.
    @pl.when(s == 0)
    def _():
        out_ref[...] = jnp.zeros_like(out_ref)

    e = enc_ref[...].astype(jnp.float32)       # (tm, lane)
    l = lam_ref[...].astype(jnp.float32)

    if sub == _SUBLANE:
        # (tm, lane) -> (sub, lane): layout-preserving reshape + vreg adds
        # (pure VPU, no per-step cross-lane reduce).
        def fold(x):
            return jnp.sum(x.reshape(tm // sub, sub, lane), axis=0)
    else:
        # Tiny blocks (tm not a multiple of 8, single-block case).
        def fold(x):
            return jnp.sum(x, axis=0, keepdims=True)

    abs_le = jnp.abs(l * e)
    log_l = jnp.log(l)

    def accumulate(v_abs, v_lam, v_log):
        out_ref[0, 0] += fold(v_abs)
        out_ref[0, 1] += fold(v_lam)
        out_ref[0, 2] += fold(v_log)

    if mask_needed:
        # Only the boundary block pays for the mask; full blocks take the
        # unmasked fast path.  Garbage values in the out-of-bounds part of a
        # partial block (including NaN/Inf from log) are discarded by the
        # where-select, never accumulated.
        b = c * n_steps + s                    # nominal row-block index
        is_full = (b * tm + tm) <= rows

        @pl.when(is_full)
        def _():
            accumulate(abs_le, l, log_l)

        @pl.when(jnp.logical_not(is_full))
        def _():
            gid = jax.lax.broadcasted_iota(jnp.int32, (tm, lane), 0) + b * tm
            valid = gid < rows
            accumulate(jnp.where(valid, abs_le, 0.0),
                       jnp.where(valid, l, 0.0),
                       jnp.where(valid, log_l, 0.0))
    else:
        accumulate(abs_le, l, log_l)


def _run_kernel(enc2, lam2, lane, rows, tm, nb, ncores, n_steps):
    """Streaming reduction of a (rows, lane) slab -> (sum|lam*enc|, sum lam, sum log lam)."""
    sub = _SUBLANE if tm % _SUBLANE == 0 else 1
    mask_needed = (ncores * n_steps * tm) > rows
    last_block = nb - 1

    def in_idx(c, s):
        b = c * n_steps + s
        if mask_needed:
            # Clamp fully-out-of-range block indices (from the ncores
            # rounding) onto the last valid block; their contribution is
            # masked to zero in-kernel.
            b = jnp.minimum(b, last_block)
        return (b, 0)

    kernel = functools.partial(
        _lambda_loss_kernel, tm=tm, lane=lane, sub=sub, rows=rows,
        n_steps=n_steps, mask_needed=mask_needed)

    total = rows * lane
    in_bytes = (jnp.dtype(enc2.dtype).itemsize + jnp.dtype(lam2.dtype).itemsize)
    cost = pl.CostEstimate(flops=5 * total, transcendentals=total,
                           bytes_accessed=total * in_bytes)

    partials = pl.pallas_call(
        kernel,
        out_shape=jax.ShapeDtypeStruct((ncores, 3, sub, lane), jnp.float32),
        grid_spec=pltpu.PrefetchScalarGridSpec(
            num_scalar_prefetch=0,
            grid=(ncores, n_steps),
            in_specs=[
                pl.BlockSpec((tm, lane), in_idx),
                pl.BlockSpec((tm, lane), in_idx),
            ],
            out_specs=pl.BlockSpec((1, 3, sub, lane), lambda c, s: (c, 0, 0, 0)),
        ),
        compiler_params=pltpu.CompilerParams(
            dimension_semantics=("parallel", "arbitrary")),
        cost_estimate=cost,
    )(enc2, lam2)

    # Final tiny combine (at most ncores * 3 * 8 * lane f32) done in XLA.
    s_abs = jnp.sum(partials[:, 0])
    s_lam = jnp.sum(partials[:, 1])
    s_log = jnp.sum(partials[:, 2])
    return s_abs, s_lam, s_log


def lambda_loss_2d(target, hyp):
    """target = (enc_hat, lam) with NCHW shape; hyp = dict(num_conv, delta, lam)."""
    enc_hat, lam = target
    delta = float(hyp["delta"])
    lam_init = float(hyp["lam"])
    _ = hyp["num_conv"]  # extracted but unused, exactly as in the PyTorch forward
    r = delta * lam_init

    B = enc_hat.shape[0]
    ne = float(enc_hat.shape[-1] * enc_hat.shape[-2])
    total = int(enc_hat.size)

    tile_bytes, ncores_hw = _device_profile()
    itemsize = jnp.dtype(enc_hat.dtype).itemsize

    # Contiguous reshape to a flat view: free (bitcast), no HBM copy.
    enc_flat = enc_hat.reshape(-1)
    lam_flat = lam.reshape(-1)

    s_abs = jnp.float32(0.0)
    s_lam = jnp.float32(0.0)
    s_log = jnp.float32(0.0)

    tiling = _choose_tiling(total, itemsize, tile_bytes, ncores_hw)
    if tiling is not None:
        lane, rows, tm, nb, ncores, n_steps = tiling
        s_abs, s_lam, s_log = _run_kernel(
            enc_flat.reshape(rows, lane), lam_flat.reshape(rows, lane),
            lane, rows, tm, nb, ncores, n_steps)
    else:
        # TODO(synk): flat length not a multiple of 128 (rare for NCHW conv
        # tensors) — kernel covers the largest 128-aligned prefix (one extra
        # XLA slice copy of that prefix); the <128-element tail is reduced in
        # plain JAX.
        main = (total // 128) * 128
        if main:
            lane, rows, tm, nb, ncores, n_steps = _choose_tiling(
                main, itemsize, tile_bytes, ncores_hw)
            s_abs, s_lam, s_log = _run_kernel(
                jax.lax.slice(enc_flat, (0,), (main,)).reshape(rows, lane),
                jax.lax.slice(lam_flat, (0,), (main,)).reshape(rows, lane),
                lane, rows, tm, nb, ncores, n_steps)
        if main < total:
            te = jax.lax.slice(enc_flat, (main,), (total,)).astype(jnp.float32)
            tl = jax.lax.slice(lam_flat, (main,), (total,)).astype(jnp.float32)
            s_abs = s_abs + jnp.sum(jnp.abs(tl * te))
            s_lam = s_lam + jnp.sum(tl)
            s_log = s_log + jnp.sum(jnp.log(tl))

    return s_abs / float(B) + delta * s_lam - (ne + r - 1.0) * s_log


def lambda_loss_2d_ref(target, hyp):
    """Pure-JAX reference mirroring the PyTorch forward."""
    enc_hat, lam = target
    delta = float(hyp["delta"])
    lam_init = float(hyp["lam"])
    r = delta * lam_init
    ne = enc_hat.shape[-1] * enc_hat.shape[-2]
    lam_enc_l1 = jnp.mean(jnp.sum(jnp.abs(lam * enc_hat), axis=(-1, -2, -3)))
    return (lam_enc_l1
            + jnp.sum(lam * delta)
            - (ne + r - 1.0) * jnp.sum(jnp.log(lam)))


if __name__ == "__main__":
    key = jax.random.PRNGKey(0)
    k_enc, k_lam = jax.random.split(key)

    B, C, H, W = 2, 4, 16, 16
    enc_hat = jax.random.normal(k_enc, (B, C, H, W), dtype=jnp.float32)
    # lam must be positive (log is taken)
    lam = jax.random.uniform(k_lam, (B, C, H, W), dtype=jnp.float32,
                             minval=0.5, maxval=1.5)

    hyp = {"num_conv": 3, "delta": 0.01, "lam": 2.0}

    out = lambda_loss_2d((enc_hat, lam), hyp)
    out = jax.block_until_ready(out)

    ref = lambda_loss_2d_ref((enc_hat, lam), hyp)
    assert jnp.allclose(out, ref, rtol=1e-4, atol=1e-4), (out, ref)

    print("KERNEL_OK")
</pallas_src>

<mosaic_0001>
module attributes {stable_mosaic.version = 11 : i64} {
  func.func @_lambda_loss_kernel(%arg0: i32, %arg1: i32, %arg2: memref<2x1024xf32, #tpu.memory_space<vmem>>, %arg3: memref<2x1024xf32, #tpu.memory_space<vmem>>, %arg4: memref<1x3x1x1024xf32, #tpu.memory_space<vmem>>) attributes {dimension_semantics = [#tpu.dimension_semantics<parallel>, #tpu.dimension_semantics<arbitrary>], iteration_bounds = array<i64: 1, 1>, scalar_prefetch = 0 : i64, scratch_operands = 0 : i64, tpu.core_type = #tpu.core_type<tc>, window_params = [{transform_indices = @transform_0, window_bounds = array<i64: 2, 1024>}, {transform_indices = @transform_1, window_bounds = array<i64: 2, 1024>}, {transform_indices = @transform_2, window_bounds = array<i64: 1, 3, 1, 1024>}]} {
    %c0_i32 = arith.constant 0 : i32
    %0 = arith.cmpi eq, %arg1, %c0_i32 : i32
    %1 = arith.extui %0 : i1 to i32
    %c0_i32_0 = arith.constant 0 : i32
    %2 = arith.cmpi ne, %1, %c0_i32_0 : i32
    scf.if %2 {
      %cst_28 = arith.constant 0.000000e+00 : f32
      %32 = vector.broadcast %cst_28 : f32 to vector<1x3x1x1024xf32>
      %c0_29 = arith.constant 0 : index
      %c0_30 = arith.constant 0 : index
      %c0_31 = arith.constant 0 : index
      %c0_32 = arith.constant 0 : index
      %33 = vector.load %arg4[%c0_29, %c0_30, %c0_31, %c0_32] : memref<1x3x1x1024xf32, #tpu.memory_space<vmem>>, vector<1x3x1x1024xf32>
      tpu.vector_store %arg4[%c0_29, %c0_30, %c0_31, %c0_32], %32 {strides = array<i32>} : memref<1x3x1x1024xf32, #tpu.memory_space<vmem>>, vector<1x3x1x1024xf32>,
    } else {
    }
    %c0 = arith.constant 0 : index
    %c0_1 = arith.constant 0 : index
    %3 = vector.load %arg2[%c0, %c0_1] : memref<2x1024xf32, #tpu.memory_space<vmem>>, vector<2x1024xf32>
    %c0_2 = arith.constant 0 : index
    %c0_3 = arith.constant 0 : index
    %4 = vector.load %arg3[%c0_2, %c0_3] : memref<2x1024xf32, #tpu.memory_space<vmem>>, vector<2x1024xf32>
    %5 = arith.mulf %4, %3 : vector<2x1024xf32>
    %6 = math.absf %5 : vector<2x1024xf32>
    %7 = math.log %4 : vector<2x1024xf32>
    %c0_4 = arith.constant 0 : index
    %c0_5 = arith.constant 0 : index
    %c0_6 = arith.constant 0 : index
    %c0_7 = arith.constant 0 : index
    %8 = vector.load %arg4[%c0_4, %c0_5, %c0_6, %c0_7] : memref<1x3x1x1024xf32, #tpu.memory_space<vmem>>, vector<1x1x1x1024xf32>
    %9 = vector.shape_cast %8 : vector<1x1x1x1024xf32> to vector<1x1024xf32>
    %cst = arith.constant dense<0.000000e+00> : vector<1024xf32>
    %10 = vector.multi_reduction <add>, %6, %cst [0] : vector<2x1024xf32> to vector<1024xf32>
    %11 = vector.shape_cast %10 : vector<1024xf32> to vector<1x1024xf32>
    %12 = arith.addf %9, %11 : vector<1x1024xf32>
    %c0_8 = arith.constant 0 : index
    %c0_9 = arith.constant 0 : index
    %c0_10 = arith.constant 0 : index
    %c0_11 = arith.constant 0 : index
    %13 = vector.load %arg4[%c0_8, %c0_9, %c0_10, %c0_11] : memref<1x3x1x1024xf32, #tpu.memory_space<vmem>>, vector<1x1x1x1024xf32>
    %14 = vector.shape_cast %13 : vector<1x1x1x1024xf32> to vector<1x1024xf32>
    %15 = vector.shape_cast %12 : vector<1x1024xf32> to vector<1x1x1x1024xf32>
    tpu.vector_store %arg4[%c0_8, %c0_9, %c0_10, %c0_11], %15 {strides = array<i32>} : memref<1x3x1x1024xf32, #tpu.memory_space<vmem>>, vector<1x1x1x1024xf32>,
    %c0_12 = arith.constant 0 : index
    %c1 = arith.constant 1 : index
    %c0_13 = arith.constant 0 : index
    %c0_14 = arith.constant 0 : index
    %16 = vector.load %arg4[%c0_12, %c1, %c0_13, %c0_14] : memref<1x3x1x1024xf32, #tpu.memory_space<vmem>>, vector<1x1x1x1024xf32>
    %17 = vector.shape_cast %16 : vector<1x1x1x1024xf32> to vector<1x1024xf32>
    %cst_15 = arith.constant dense<0.000000e+00> : vector<1024xf32>
    %18 = vector.multi_reduction <add>, %4, %cst_15 [0] : vector<2x1024xf32> to vector<1024xf32>
    %19 = vector.shape_cast %18 : vector<1024xf32> to vector<1x1024xf32>
    %20 = arith.addf %17, %19 : vector<1x1024xf32>
    %c0_16 = arith.constant 0 : index
    %c1_17 = arith.constant 1 : index
    %c0_18 = arith.constant 0 : index
    %c0_19 = arith.constant 0 : index
    %21 = vector.load %arg4[%c0_16, %c1_17, %c0_18, %c0_19] : memref<1x3x1x1024xf32, #tpu.memory_space<vmem>>, vector<1x1x1x1024xf32>
    %22 = vector.shape_cast %21 : vector<1x1x1x1024xf32> to vector<1x1024xf32>
    %23 = vector.shape_cast %20 : vector<1x1024xf32> to vector<1x1x1x1024xf32>
    tpu.vector_store %arg4[%c0_16, %c1_17, %c0_18, %c0_19], %23 {strides = array<i32>} : memref<1x3x1x1024xf32, #tpu.memory_space<vmem>>, vector<1x1x1x1024xf32>,
    %c0_20 = arith.constant 0 : index
    %c2 = arith.constant 2 : index
    %c0_21 = arith.constant 0 : index
    %c0_22 = arith.constant 0 : index
    %24 = vector.load %arg4[%c0_20, %c2, %c0_21, %c0_22] : memref<1x3x1x1024xf32, #tpu.memory_space<vmem>>, vector<1x1x1x1024xf32>
    %25 = vector.shape_cast %24 : vector<1x1x1x1024xf32> to vector<1x1024xf32>
    %cst_23 = arith.constant dense<0.000000e+00> : vector<1024xf32>
    %26 = vector.multi_reduction <add>, %7, %cst_23 [0] : vector<2x1024xf32> to vector<1024xf32>
    %27 = vector.shape_cast %26 : vector<1024xf32> to vector<1x1024xf32>
    %28 = arith.addf %25, %27 : vector<1x1024xf32>
    %c0_24 = arith.constant 0 : index
    %c2_25 = arith.constant 2 : index
    %c0_26 = arith.constant 0 : index
    %c0_27 = arith.constant 0 : index
    %29 = vector.load %arg4[%c0_24, %c2_25, %c0_26, %c0_27] : memref<1x3x1x1024xf32, #tpu.memory_space<vmem>>, vector<1x1x1x1024xf32>
    %30 = vector.shape_cast %29 : vector<1x1x1x1024xf32> to vector<1x1024xf32>
    %31 = vector.shape_cast %28 : vector<1x1024xf32> to vector<1x1x1x1024xf32>
    tpu.vector_store %arg4[%c0_24, %c2_25, %c0_26, %c0_27], %31 {strides = array<i32>} : memref<1x3x1x1024xf32, #tpu.memory_space<vmem>>, vector<1x1x1x1024xf32>,
    return
  }
  func.func @transform_0(%arg0: i32, %arg1: i32) -> (i32, i32) {
    %c1_i32 = arith.constant 1 : i32
    %0 = arith.muli %arg0, %c1_i32 : i32
    %1 = arith.addi %0, %arg1 : i32
    %c0_i32 = arith.constant 0 : i32
    %c0_i32_0 = arith.constant 0 : i32
    return %1, %c0_i32 : i32, i32
  }
  func.func @transform_1(%arg0: i32, %arg1: i32) -> (i32, i32) {
    %c1_i32 = arith.constant 1 : i32
    %0 = arith.muli %arg0, %c1_i32 : i32
    %1 = arith.addi %0, %arg1 : i32
    %c0_i32 = arith.constant 0 : i32
    %c0_i32_0 = arith.constant 0 : i32
    return %1, %c0_i32 : i32, i32
  }
  func.func @transform_2(%arg0: i32, %arg1: i32) -> (i32, i32, i32, i32) {
    %c0_i32 = arith.constant 0 : i32
    %c0_i32_0 = arith.constant 0 : i32
    %c0_i32_1 = arith.constant 0 : i32
    %c0_i32_2 = arith.constant 0 : i32
    return %arg0, %c0_i32, %c0_i32_0, %c0_i32_1 : i32, i32, i32, i32
  }
}

</mosaic_0001>

<llo_original>
// kernel: tpu_custom_call.1
$region0: #{tpu_custom_call.1}
  #allocation0 [shape = 'u32[]', space=smem, size = 0x4, offset = 0x4, fixed_abs, tag = 'smem constant byte address 0x4 - core index']
  #allocation1 [shape = 'u32[144,128]{1,0:T(1,128)}', space=vmem, size = 0x12000, scoped, tag = 'internal scratch']
  %s0 = inlined_call_operand.hbm [shape: f32[2,1024], index: 0, kind: input, shape index: {}]
  %s1 = inlined_call_operand.hbm [shape: f32[2,1024], index: 1, kind: input, shape index: {}]
  %s2 = inlined_call_operand.hbm [shape: f32[1,3,1,1024], index: 2, kind: output, shape index: {}]
  %s3 = sld [smem:[#allocation0]]
  $region30: #{tpu_custom_call.1} parent=0
    _
  %s5 = ssub.s32 1, %s3
  %s6 = scalar_select 0, %s5, %s3
  $region1: #{tpu_custom_call.1} parent=0
    #allocation2 [shape = 'u8[8192]{0}', space=vmem, size = 0x2000, scoped, tag = 'input window, operand 0, single buffered']
    #allocation3 [shape = 's32[1]{0}', space=sflag, size = 0x4, scoped, tag = 'scoped memory for tpu_custom_call.1']
    #allocation4 [shape = 's32[1]{0}', space=sflag, size = 0x4, scoped, tag = 'scoped memory for tpu_custom_call.1']
    #allocation5 [shape = 'u8[8192]{0}', space=vmem, size = 0x2000, scoped, tag = 'input window, operand 1, single buffered']
    #allocation6 [shape = 's32[1]{0}', space=sflag, size = 0x4, scoped, tag = 'scoped memory for tpu_custom_call.1']
    #allocation7 [shape = 'u8[12288]{0}', space=vmem, size = 0x3000, scoped, tag = 'output window, operand 0, single buffered']
    %7 = vsyncpa [#allocation3], 0
    %8 = vsyncpa [#allocation6], 0
    %9 = vsyncpa [#allocation4], 0
    // Predicated region
    $region2: #{tpu_custom_call.1} parent=1 // pred_check
      _
    $region3: #{tpu_custom_call.1} parent=1 // pred_check_branch
      %11 = sbr.rel (0) target = $region5
    $region4: #{tpu_custom_call.1} parent=1 // pred_region
      %s12 = sadd.s32 0, 0
      %s14 = ssub.s32 256, 256
      %15 = vsyncadd [#allocation3], %s14
      %s16 = smul.addr %s12, 8
      %s17 = smul.addr %s16, 32
      %s18 = scalar_lea.hbm %s0, %s17
      %s20 = sshll.u32 [#allocation2], 4
      %s21 = int_to_ptr.vmem [resolvable:$true] %s20
      %23 = dma.hbm_to_vmem [thread:$0]  %s18, 256, %s21, [#allocation3]
    $region5: #{tpu_custom_call.1} parent=1 // pred_fallthru
      _
    // Predicated region
    $region6: #{tpu_custom_call.1} parent=1 // pred_check
      _
    $region7: #{tpu_custom_call.1} parent=1 // pred_check_branch
      %25 = sbr.rel (0) target = $region9
    $region8: #{tpu_custom_call.1} parent=1 // pred_region
      %s26 = sadd.s32 0, 0
      %s28 = ssub.s32 256, 256
      %29 = vsyncadd [#allocation6], %s28
      %s30 = smul.addr %s26, 8
      %s31 = smul.addr %s30, 32
      %s32 = scalar_lea.hbm %s1, %s31
      %s34 = sshll.u32 [#allocation5], 4
      %s35 = int_to_ptr.vmem [resolvable:$true] %s34
      %37 = dma.hbm_to_vmem [thread:$0]  %s32, 256, %s35, [#allocation6]
    $region9: #{tpu_custom_call.1} parent=1 // pred_fallthru
      _
    // Predicated region
    $region10: #{tpu_custom_call.1} parent=1 // pred_check
      _
    $region11: #{tpu_custom_call.1} parent=1 // pred_check_branch
      %39 = sbr.rel (0) target = $region13
    $region12: #{tpu_custom_call.1} parent=1 // pred_region
      %40 = dma.done [#allocation3], 256
    $region13: #{tpu_custom_call.1} parent=1 // pred_fallthru
      _
    // Predicated region
    $region14: #{tpu_custom_call.1} parent=1 // pred_check
      _
    $region15: #{tpu_custom_call.1} parent=1 // pred_check_branch
      %42 = sbr.rel (0) target = $region17
    $region16: #{tpu_custom_call.1} parent=1 // pred_region
      %43 = dma.done [#allocation6], 256
    $region17: #{tpu_custom_call.1} parent=1 // pred_fallthru
      _
    %s44 = sadd.s32 0, 0
    %s45 = sadd.s32 0, 0
    %p46 = scmp.eq.s32.totalorder 0, 0
    // Predicated region
    $region18: #{tpu_custom_call.1} parent=1 // pred_check
      %p47 = pneg %p46
    $region19: #{tpu_custom_call.1} parent=1 // pred_check_branch
      %49 = sbr.rel (%p47) target = $region21
    $region20: #{tpu_custom_call.1} parent=1 // pred_region
      %50 = vst [vmem:[#allocation7] sm:$0xff] 0.0
      %51 = vst [vmem:[#allocation7 + $0x8] sm:$0xff] 0.0
      %52 = vst [vmem:[#allocation7 + $0x10] sm:$0xff] 0.0
    $region21: #{tpu_custom_call.1} parent=1 // pred_fallthru
      _
    %v53 = vld [vmem:[#allocation2] sm:$0xff]
    %v54 = vld [vmem:[#allocation2 + $0x8] sm:$0xff]
    %v55 = vld [vmem:[#allocation5] sm:$0xff]
    %v56 = vld [vmem:[#allocation5 + $0x8] sm:$0xff]
    %v57 = vmul.f32 %v55, %v53
    %v58 = vmul.f32 %v56, %v54
    %v59 = vand.u32 2147483647, %v57
    %v60 = vand.u32 2147483647, %v58
    %v61 = vlog2.pop %v55
    %v62 = vmul.f32 %v61, 0.6931472
    %v63 = vlog2.pop %v56
    %v64 = vmul.f32 %v63, 0.6931472
    %v65 = vld [vmem:[#allocation7] sm:$0xff]
    %v68 = vcombine.high %v59, %v59
    %v70 = vunpack.c.l.s4 1983009808
    %v71 = vunpack.c.0.s8 %v70
    %v72 = vlaneseq
    %v73 = vshrl.u32 %v72, 7
    %v74 = vsub.s32 %v71, %v73
    %v75 = vrot.slane %v59, %v74
    %v77 = vunpack.c.l.s4 1983009808
    %v78 = vunpack.c.0.s8 %v77
    %v79 = vlaneseq
    %v80 = vshrl.u32 %v79, 7
    %v81 = vsub.s32 %v78, %v80
    %v82 = vrot.slane %v68, %v81
    %v83 = vcombine.high %v75, %v75
    %v84 = vcombine.high %v82, %v82
    %v85 = vcombine.high %v60, %v60
    %v87 = vunpack.c.l.s4 1983009808
    %v88 = vunpack.c.0.s8 %v87
    %v89 = vlaneseq
    %v90 = vshrl.u32 %v89, 7
    %v91 = vsub.s32 %v88, %v90
    %v92 = vrot.slane %v60, %v91
    %v94 = vunpack.c.l.s4 1983009808
    %v95 = vunpack.c.0.s8 %v94
    %v96 = vlaneseq
    %v97 = vshrl.u32 %v96, 7
    %v98 = vsub.s32 %v95, %v97
    %v99 = vrot.slane %v85, %v98
    %v100 = vcombine.high %v92, %v92
    %v101 = vcombine.high %v99, %v99
    %vm110 = vcmask 1041408
    %v111 = vsel %vm110, %v75, 0.0
    %v112 = vrot.slane %v111, 4
    %v113 = vadd.f32 %v111, %v112
    %v114 = vrot.slane %v113, 2
    %v115 = vadd.f32 %v113, %v114
    %v116 = vrot.slane %v115, 1
    %v117 = vadd.f32 %v115, %v116
    %v118 = vsel %vm110, %v83, 0.0
    %v119 = vrot.slane %v118, 4
    %v120 = vadd.f32 %v118, %v119
    %v121 = vrot.slane %v120, 2
    %v122 = vadd.f32 %v120, %v121
    %v123 = vrot.slane %v122, 1
    %v124 = vadd.f32 %v122, %v123
    %v125 = vsel %vm110, %v82, 0.0
    %v126 = vrot.slane %v125, 4
    %v127 = vadd.f32 %v125, %v126
    %v128 = vrot.slane %v127, 2
    %v129 = vadd.f32 %v127, %v128
    %v130 = vrot.slane %v129, 1
    %v131 = vadd.f32 %v129, %v130
    %v132 = vsel %vm110, %v84, 0.0
    %v133 = vrot.slane %v132, 4
    %v134 = vadd.f32 %v132, %v133
    %v135 = vrot.slane %v134, 2
    %v136 = vadd.f32 %v134, %v135
    %v137 = vrot.slane %v136, 1
    %v138 = vadd.f32 %v136, %v137
    %v139 = vsel %vm110, %v92, 0.0
    %v140 = vrot.slane %v139, 4
    %v141 = vadd.f32 %v139, %v140
    %v142 = vrot.slane %v141, 2
    %v143 = vadd.f32 %v141, %v142
    %v144 = vrot.slane %v143, 1
    %v145 = vadd.f32 %v143, %v144
    %v146 = vsel %vm110, %v100, 0.0
    %v147 = vrot.slane %v146, 4
    %v148 = vadd.f32 %v146, %v147
    %v149 = vrot.slane %v148, 2
    %v150 = vadd.f32 %v148, %v149
    %v151 = vrot.slane %v150, 1
    %v152 = vadd.f32 %v150, %v151
    %v153 = vsel %vm110, %v99, 0.0
    %v154 = vrot.slane %v153, 4
    %v155 = vadd.f32 %v153, %v154
    %v156 = vrot.slane %v155, 2
    %v157 = vadd.f32 %v155, %v156
    %v158 = vrot.slane %v157, 1
    %v159 = vadd.f32 %v157, %v158
    %v160 = vsel %vm110, %v101, 0.0
    %v161 = vrot.slane %v160, 4
    %v162 = vadd.f32 %v160, %v161
    %v163 = vrot.slane %v162, 2
    %v164 = vadd.f32 %v162, %v163
    %v165 = vrot.slane %v164, 1
    %v166 = vadd.f32 %v164, %v165
    %v175 = vcombine.low %v117, %v124
    %v176 = vcombine.low %v131, %v138
    %v177 = vcombine.low %v145, %v152
    %v178 = vcombine.low %v159, %v166
    %v180 = vunpack.c.l.s4 1966171168
    %v181 = vunpack.c.0.s8 %v180
    %v182 = vlaneseq
    %v183 = vshrl.u32 %v182, 7
    %v184 = vsub.s32 %v181, %v183
    %v185 = vrot.slane %v175, %v184
    %v187 = vunpack.c.l.s4 1966171168
    %v188 = vunpack.c.0.s8 %v187
    %v189 = vlaneseq
    %v190 = vshrl.u32 %v189, 7
    %v191 = vsub.s32 %v188, %v190
    %v192 = vrot.slane %v176, %v191
    %v194 = vunpack.c.l.s4 1966171168
    %v195 = vunpack.c.0.s8 %v194
    %v196 = vlaneseq
    %v197 = vshrl.u32 %v196, 7
    %v198 = vsub.s32 %v195, %v197
    %v199 = vrot.slane %v177, %v198
    %v201 = vunpack.c.l.s4 1966171168
    %v202 = vunpack.c.0.s8 %v201
    %v203 = vlaneseq
    %v204 = vshrl.u32 %v203, 7
    %v205 = vsub.s32 %v202, %v204
    %v206 = vrot.slane %v178, %v205
    %v207 = vcombine.low %v185, %v192
    %v208 = vcombine.low %v199, %v206
    %v210 = vunpack.c.l.s4 1966171168
    %v211 = vunpack.c.0.s8 %v210
    %v212 = vlaneseq
    %v213 = vshrl.u32 %v212, 7
    %v214 = vsub.s32 %v211, %v213
    %v215 = vrot.slane %v207, %v214
    %v217 = vunpack.c.l.s4 1966171168
    %v218 = vunpack.c.0.s8 %v217
    %v219 = vlaneseq
    %v220 = vshrl.u32 %v219, 7
    %v221 = vsub.s32 %v218, %v220
    %v222 = vrot.slane %v208, %v221
    %v223 = vcombine.low %v215, %v222
    %v225 = vadd.f32 %v65, %v223
    %226 = vst [vmem:[#allocation7] sm:$0xff] %v225
    %s227 = scalar_lea.vmem [#allocation7], 8
    %v228 = vld [vmem:[%s227] sm:$0xff]
    %v231 = vcombine.high %v55, %v55
    %v233 = vunpack.c.l.s4 1983009808
    %v234 = vunpack.c.0.s8 %v233
    %v235 = vlaneseq
    %v236 = vshrl.u32 %v235, 7
    %v237 = vsub.s32 %v234, %v236
    %v238 = vrot.slane %v55, %v237
    %v240 = vunpack.c.l.s4 1983009808
    %v241 = vunpack.c.0.s8 %v240
    %v242 = vlaneseq
    %v243 = vshrl.u32 %v242, 7
    %v244 = vsub.s32 %v241, %v243
    %v245 = vrot.slane %v231, %v244
    %v246 = vcombine.high %v238, %v238
    %v247 = vcombine.high %v245, %v245
    %v248 = vcombine.high %v56, %v56
    %v250 = vunpack.c.l.s4 1983009808
    %v251 = vunpack.c.0.s8 %v250
    %v252 = vlaneseq
    %v253 = vshrl.u32 %v252, 7
    %v254 = vsub.s32 %v251, %v253
    %v255 = vrot.slane %v56, %v254
    %v257 = vunpack.c.l.s4 1983009808
    %v258 = vunpack.c.0.s8 %v257
    %v259 = vlaneseq
    %v260 = vshrl.u32 %v259, 7
    %v261 = vsub.s32 %v258, %v260
    %v262 = vrot.slane %v248, %v261
    %v263 = vcombine.high %v255, %v255
    %v264 = vcombine.high %v262, %v262
    %v273 = vsel %vm110, %v238, 0.0
    %v274 = vrot.slane %v273, 4
    %v275 = vadd.f32 %v273, %v274
    %v276 = vrot.slane %v275, 2
    %v277 = vadd.f32 %v275, %v276
    %v278 = vrot.slane %v277, 1
    %v279 = vadd.f32 %v277, %v278
    %v280 = vsel %vm110, %v246, 0.0
    %v281 = vrot.slane %v280, 4
    %v282 = vadd.f32 %v280, %v281
    %v283 = vrot.slane %v282, 2
    %v284 = vadd.f32 %v282, %v283
    %v285 = vrot.slane %v284, 1
    %v286 = vadd.f32 %v284, %v285
    %v287 = vsel %vm110, %v245, 0.0
    %v288 = vrot.slane %v287, 4
    %v289 = vadd.f32 %v287, %v288
    %v290 = vrot.slane %v289, 2
    %v291 = vadd.f32 %v289, %v290
    %v292 = vrot.slane %v291, 1
    %v293 = vadd.f32 %v291, %v292
    %v294 = vsel %vm110, %v247, 0.0
    %v295 = vrot.slane %v294, 4
    %v296 = vadd.f32 %v294, %v295
    %v297 = vrot.slane %v296, 2
    %v298 = vadd.f32 %v296, %v297
    %v299 = vrot.slane %v298, 1
    %v300 = vadd.f32 %v298, %v299
    %v301 = vsel %vm110, %v255, 0.0
    %v302 = vrot.slane %v301, 4
    %v303 = vadd.f32 %v301, %v302
    %v304 = vrot.slane %v303, 2
    %v305 = vadd.f32 %v303, %v304
    %v306 = vrot.slane %v305, 1
    %v307 = vadd.f32 %v305, %v306
    %v308 = vsel %vm110, %v263, 0.0
    %v309 = vrot.slane %v308, 4
    %v310 = vadd.f32 %v308, %v309
    %v311 = vrot.slane %v310, 2
    %v312 = vadd.f32 %v310, %v311
    %v313 = vrot.slane %v312, 1
    %v314 = vadd.f32 %v312, %v313
    %v315 = vsel %vm110, %v262, 0.0
    %v316 = vrot.slane %v315, 4
    %v317 = vadd.f32 %v315, %v316
    %v318 = vrot.slane %v317, 2
    %v319 = vadd.f32 %v317, %v318
    %v320 = vrot.slane %v319, 1
    %v321 = vadd.f32 %v319, %v320
    %v322 = vsel %vm110, %v264, 0.0
    %v323 = vrot.slane %v322, 4
    %v324 = vadd.f32 %v322, %v323
    %v325 = vrot.slane %v324, 2
    %v326 = vadd.f32 %v324, %v325
    %v327 = vrot.slane %v326, 1
    %v328 = vadd.f32 %v326, %v327
    %v337 = vcombine.low %v279, %v286
    %v338 = vcombine.low %v293, %v300
    %v339 = vcombine.low %v307, %v314
    %v340 = vcombine.low %v321, %v328
    %v342 = vunpack.c.l.s4 1966171168
    %v343 = vunpack.c.0.s8 %v342
    %v344 = vlaneseq
    %v345 = vshrl.u32 %v344, 7
    %v346 = vsub.s32 %v343, %v345
    %v347 = vrot.slane %v337, %v346
    %v349 = vunpack.c.l.s4 1966171168
    %v350 = vunpack.c.0.s8 %v349
    %v351 = vlaneseq
    %v352 = vshrl.u32 %v351, 7
    %v353 = vsub.s32 %v350, %v352
    %v354 = vrot.slane %v338, %v353
    %v356 = vunpack.c.l.s4 1966171168
    %v357 = vunpack.c.0.s8 %v356
    %v358 = vlaneseq
    %v359 = vshrl.u32 %v358, 7
    %v360 = vsub.s32 %v357, %v359
    %v361 = vrot.slane %v339, %v360
    %v363 = vunpack.c.l.s4 1966171168
    %v364 = vunpack.c.0.s8 %v363
    %v365 = vlaneseq
    %v366 = vshrl.u32 %v365, 7
    %v367 = vsub.s32 %v364, %v366
    %v368 = vrot.slane %v340, %v367
    %v369 = vcombine.low %v347, %v354
    %v370 = vcombine.low %v361, %v368
    %v372 = vunpack.c.l.s4 1966171168
    %v373 = vunpack.c.0.s8 %v372
    %v374 = vlaneseq
    %v375 = vshrl.u32 %v374, 7
    %v376 = vsub.s32 %v373, %v375
    %v377 = vrot.slane %v369, %v376
    %v379 = vunpack.c.l.s4 1966171168
    %v380 = vunpack.c.0.s8 %v379
    %v381 = vlaneseq
    %v382 = vshrl.u32 %v381, 7
    %v383 = vsub.s32 %v380, %v382
    %v384 = vrot.slane %v370, %v383
    %v385 = vcombine.low %v377, %v384
    %v387 = vadd.f32 %v228, %v385
    %388 = vst [vmem:[%s227] sm:$0xff] %v387
    %s389 = scalar_lea.vmem [#allocation7], 16
    %v390 = vld [vmem:[%s389] sm:$0xff]
    %v393 = vcombine.high %v62, %v62
    %v395 = vunpack.c.l.s4 1983009808
    %v396 = vunpack.c.0.s8 %v395
    %v397 = vlaneseq
    %v398 = vshrl.u32 %v397, 7
    %v399 = vsub.s32 %v396, %v398
    %v400 = vrot.slane %v62, %v399
    %v402 = vunpack.c.l.s4 1983009808
    %v403 = vunpack.c.0.s8 %v402
    %v404 = vlaneseq
    %v405 = vshrl.u32 %v404, 7
    %v406 = vsub.s32 %v403, %v405
    %v407 = vrot.slane %v393, %v406
    %v408 = vcombine.high %v400, %v400
    %v409 = vcombine.high %v407, %v407
    %v410 = vcombine.high %v64, %v64
    %v412 = vunpack.c.l.s4 1983009808
    %v413 = vunpack.c.0.s8 %v412
    %v414 = vlaneseq
    %v415 = vshrl.u32 %v414, 7
    %v416 = vsub.s32 %v413, %v415
    %v417 = vrot.slane %v64, %v416
    %v419 = vunpack.c.l.s4 1983009808
    %v420 = vunpack.c.0.s8 %v419
    %v421 = vlaneseq
    %v422 = vshrl.u32 %v421, 7
    %v423 = vsub.s32 %v420, %v422
    %v424 = vrot.slane %v410, %v423
    %v425 = vcombine.high %v417, %v417
    %v426 = vcombine.high %v424, %v424
    %v435 = vsel %vm110, %v400, 0.0
    %v436 = vrot.slane %v435, 4
    %v437 = vadd.f32 %v435, %v436
    %v438 = vrot.slane %v437, 2
    %v439 = vadd.f32 %v437, %v438
    %v440 = vrot.slane %v439, 1
    %v441 = vadd.f32 %v439, %v440
    %v442 = vsel %vm110, %v408, 0.0
    %v443 = vrot.slane %v442, 4
    %v444 = vadd.f32 %v442, %v443
    %v445 = vrot.slane %v444, 2
    %v446 = vadd.f32 %v444, %v445
    %v447 = vrot.slane %v446, 1
    %v448 = vadd.f32 %v446, %v447
    %v449 = vsel %vm110, %v407, 0.0
    %v450 = vrot.slane %v449, 4
    %v451 = vadd.f32 %v449, %v450
    %v452 = vrot.slane %v451, 2
    %v453 = vadd.f32 %v451, %v452
    %v454 = vrot.slane %v453, 1
    %v455 = vadd.f32 %v453, %v454
    %v456 = vsel %vm110, %v409, 0.0
    %v457 = vrot.slane %v456, 4
    %v458 = vadd.f32 %v456, %v457
    %v459 = vrot.slane %v458, 2
    %v460 = vadd.f32 %v458, %v459
    %v461 = vrot.slane %v460, 1
    %v462 = vadd.f32 %v460, %v461
    %v463 = vsel %vm110, %v417, 0.0
    %v464 = vrot.slane %v463, 4
    %v465 = vadd.f32 %v463, %v464
    %v466 = vrot.slane %v465, 2
    %v467 = vadd.f32 %v465, %v466
    %v468 = vrot.slane %v467, 1
    %v469 = vadd.f32 %v467, %v468
    %v470 = vsel %vm110, %v425, 0.0
    %v471 = vrot.slane %v470, 4
    %v472 = vadd.f32 %v470, %v471
    %v473 = vrot.slane %v472, 2
    %v474 = vadd.f32 %v472, %v473
    %v475 = vrot.slane %v474, 1
    %v476 = vadd.f32 %v474, %v475
    %v477 = vsel %vm110, %v424, 0.0
    %v478 = vrot.slane %v477, 4
    %v479 = vadd.f32 %v477, %v478
    %v480 = vrot.slane %v479, 2
    %v481 = vadd.f32 %v479, %v480
    %v482 = vrot.slane %v481, 1
    %v483 = vadd.f32 %v481, %v482
    %v484 = vsel %vm110, %v426, 0.0
    %v485 = vrot.slane %v484, 4
    %v486 = vadd.f32 %v484, %v485
    %v487 = vrot.slane %v486, 2
    %v488 = vadd.f32 %v486, %v487
    %v489 = vrot.slane %v488, 1
    %v490 = vadd.f32 %v488, %v489
    %v499 = vcombine.low %v441, %v448
    %v500 = vcombine.low %v455, %v462
    %v501 = vcombine.low %v469, %v476
    %v502 = vcombine.low %v483, %v490
    %v504 = vunpack.c.l.s4 1966171168
    %v505 = vunpack.c.0.s8 %v504
    %v506 = vlaneseq
    %v507 = vshrl.u32 %v506, 7
    %v508 = vsub.s32 %v505, %v507
    %v509 = vrot.slane %v499, %v508
    %v511 = vunpack.c.l.s4 1966171168
    %v512 = vunpack.c.0.s8 %v511
    %v513 = vlaneseq
    %v514 = vshrl.u32 %v513, 7
    %v515 = vsub.s32 %v512, %v514
    %v516 = vrot.slane %v500, %v515
    %v518 = vunpack.c.l.s4 1966171168
    %v519 = vunpack.c.0.s8 %v518
    %v520 = vlaneseq
    %v521 = vshrl.u32 %v520, 7
    %v522 = vsub.s32 %v519, %v521
    %v523 = vrot.slane %v501, %v522
    %v525 = vunpack.c.l.s4 1966171168
    %v526 = vunpack.c.0.s8 %v525
    %v527 = vlaneseq
    %v528 = vshrl.u32 %v527, 7
    %v529 = vsub.s32 %v526, %v528
    %v530 = vrot.slane %v502, %v529
    %v531 = vcombine.low %v509, %v516
    %v532 = vcombine.low %v523, %v530
    %v534 = vunpack.c.l.s4 1966171168
    %v535 = vunpack.c.0.s8 %v534
    %v536 = vlaneseq
    %v537 = vshrl.u32 %v536, 7
    %v538 = vsub.s32 %v535, %v537
    %v539 = vrot.slane %v531, %v538
    %v541 = vunpack.c.l.s4 1966171168
    %v542 = vunpack.c.0.s8 %v541
    %v543 = vlaneseq
    %v544 = vshrl.u32 %v543, 7
    %v545 = vsub.s32 %v542, %v544
    %v546 = vrot.slane %v532, %v545
    %v547 = vcombine.low %v539, %v546
    %v549 = vadd.f32 %v390, %v547
    %550 = vst [vmem:[%s389] sm:$0xff] %v549
    // Predicated region
    $region22: #{tpu_custom_call.1} parent=1 // pred_check
      _
    $region23: #{tpu_custom_call.1} parent=1 // pred_check_branch
      %552 = sbr.rel (0) target = $region25
    $region24: #{tpu_custom_call.1} parent=1 // pred_region
      %s554 = ssub.s32 384, 384
      %555 = vsyncadd [#allocation4], %s554
      %s556 = sshll.u32 [#allocation7], 4
      %s557 = int_to_ptr.vmem [resolvable:$true] %s556
      %562 = dma.vmem_to_hbm [thread:$0]  %s557, 384, %s2, [#allocation4], 128, 128, 8
    $region25: #{tpu_custom_call.1} parent=1 // pred_fallthru
      _
    // Predicated region
    $region26: #{tpu_custom_call.1} parent=1 // pred_check
      _
    $region27: #{tpu_custom_call.1} parent=1 // pred_check_branch
      %564 = sbr.rel (0) target = $region29
    $region28: #{tpu_custom_call.1} parent=1 // pred_region
      %565 = dma.done [#allocation4], 384
    $region29: #{tpu_custom_call.1} parent=1 // pred_fallthru
      _
    %566 = vsyncpa [#allocation3], 1
    %567 = vsyncpa [#allocation6], 1
    %568 = vsyncpa [#allocation4], 1

</llo_original>
